<compile_context>
chip_gen: v7x
topology: tpu7x:2x2x1
jax: 0.10.0
libtpu: 0.0.40
codegen_flags: <defaults>
</compile_context>

<pallas_src>
import math
from functools import partial

import jax
import jax.numpy as jnp
from jax.experimental import pallas as pl
from jax.experimental.pallas import tpu as pltpu


def actor_kernel(xa_ref, w1_ref, w2h_ref, b_ref, out_ref, *, S, A, H, use_action):
    """One batch tile; batch lives on the lane (last) dimension.

    xa_ref  : (S+A, TB)    rows 0:S = state, rows S:S+A = action (or eps)
    w1_ref  : (H, S+A)     fc1 weight, zero column(s) over the action rows
    w2h_ref : (H+2A, H)    rows 0:H = fc2 weight, rows H: = [mu_head ; sigma_head]
    b_ref   : (2H+2A, 1)   packed biases [b1 ; b2 ; bmu ; bsig]
    out_ref : (3A, TB)     rows [act ; log_prob ; entropy]
    """
    xa = xa_ref[...]

    # MLP trunk: MXU matmuls (batch = dense lane axis), VPU relu.
    h1 = jnp.maximum(
        jnp.dot(w1_ref[...], xa, preferred_element_type=jnp.float32)
        + b_ref[0:H, :], 0.0)
    h2 = jnp.maximum(
        jnp.dot(w2h_ref[0:H, :], h1, preferred_element_type=jnp.float32)
        + b_ref[H:2 * H, :], 0.0)

    # Fused mu|sigma heads: one (2A, H) @ (H, TB) matmul.
    heads = (jnp.dot(w2h_ref[H:H + 2 * A, :], h2,
                     preferred_element_type=jnp.float32)
             + b_ref[2 * H:2 * H + 2 * A, :])
    mu = heads[:A, :]
    s_pre = heads[A:, :]

    # Numerically stable softplus with a single exp + log1p.
    sigma = jnp.maximum(s_pre, 0.0) + jnp.log1p(jnp.exp(-jnp.abs(s_pre)))
    log_sigma = jnp.log(sigma)
    half_log2pi = 0.5 * math.log(2.0 * math.pi)

    an = xa_ref[S:S + A, :]
    if use_action:                       # trace-time specialization (Python bool)
        act = an
        z = (act - mu) * pl.reciprocal(sigma)     # exact reciprocal (1e-5 tolerance)
    else:
        act = mu + sigma * an            # an = eps; reparameterized sample
        z = an                           # (act - mu)/sigma == eps exactly

    # Direct lane-dense slice stores (no sublane concat/relayout).
    out_ref[0:A, :] = act
    out_ref[A:2 * A, :] = -0.5 * z * z - log_sigma - half_log2pi
    out_ref[2 * A:3 * A, :] = 0.5 + half_log2pi + log_sigma


def init_actor_params(key, state_dim, action_dim):
    """PyTorch nn.Linear-style init (uniform +-1/sqrt(fan_in)).
    Weights stored in PyTorch (out, in) layout; biases as (out,)."""
    ks = jax.random.split(key, 8)

    def linear(kw, kb, fan_in, fan_out):
        bound = 1.0 / math.sqrt(fan_in)
        w = jax.random.uniform(kw, (fan_out, fan_in), jnp.float32, -bound, bound)
        b = jax.random.uniform(kb, (fan_out,), jnp.float32, -bound, bound)
        return w, b

    w1, b1 = linear(ks[0], ks[1], state_dim, 16)
    w2, b2 = linear(ks[2], ks[3], 16, 16)
    wmu, bmu = linear(ks[4], ks[5], 16, action_dim)
    wsig, bsig = linear(ks[6], ks[7], 16, action_dim)
    return dict(w1=w1, b1=b1, w2=w2, b2=b2,
                wmu=wmu, bmu=bmu, wsig=wsig, bsig=bsig)


def _choose_tile(B, tb_max):
    """Batch lane-tile width: large tiles (amortize ~0.35us/step overhead) but
    keep >=2 tiles once the batch is big enough so both v7x TCs get work."""
    b128 = pl.cdiv(B, 128) * 128
    if b128 <= 128:
        return 128
    return max(128, min(tb_max, (b128 // 2) // 128 * 128))


@partial(jax.jit, static_argnames=("use_action", "tb_max"))
def _actor_pallas(params, state, an, use_action, tb_max=65536):
    state = state.astype(jnp.float32)
    an = an.astype(jnp.float32)
    B, S = state.shape
    A = an.shape[1]
    H = params["w1"].shape[0]      # 16

    TB = _choose_tile(B, tb_max)
    B_pad = pl.cdiv(B, TB) * TB
    pad = B_pad - B

    # Single batch-tiled input slab: [state ; action-or-eps], batch on lanes.
    xa = jnp.concatenate([state, an], axis=1).T                       # (S+A, B)
    if pad:
        xa = jnp.pad(xa, ((0, 0), (0, pad)))

    # fc1 weight with zero columns over the action rows (consumes xa directly).
    w1p = jnp.concatenate(
        [params["w1"], jnp.zeros((H, A), jnp.float32)], axis=1)       # (H, S+A)
    # fc2 + fused mu|sigma head weights in one array.
    w2h = jnp.concatenate(
        [params["w2"], params["wmu"], params["wsig"]], axis=0)        # (H+2A, H)
    # All biases packed into one column.
    bpack = jnp.concatenate(
        [params["b1"], params["b2"], params["bmu"], params["bsig"]])[:, None]

    n_param = w1p.size + w2h.size + bpack.size
    cost = pl.CostEstimate(
        flops=2 * B_pad * ((S + A) * H + H * H + H * 2 * A) + 12 * B_pad * A,
        transcendentals=4 * B_pad * A,
        bytes_accessed=4 * (B_pad * (S + A + 3 * A) + n_param),
    )

    # VMEM budget: xa + out tiles, sublane-padded to 8 rows, double-buffered
    # (~128*TB bytes) plus headroom; capped at 48 MiB for v7x's 64 MiB VMEM.
    vmem_limit = int(min(48 << 20, max(32 << 20, (4 << 20) + 2 * 2 * 8 * TB * 4)))

    grid_spec = pltpu.PrefetchScalarGridSpec(
        num_scalar_prefetch=0,
        grid=(B_pad // TB,),
        in_specs=[
            pl.BlockSpec((S + A, TB), lambda i: (0, i)),        # fused state|an
            pl.BlockSpec((H, S + A), lambda i: (0, 0)),         # fc1 weight
            pl.BlockSpec((H + 2 * A, H), lambda i: (0, 0)),     # fc2 + heads weight
            pl.BlockSpec((2 * H + 2 * A, 1), lambda i: (0, 0)),  # packed biases
        ],
        out_specs=pl.BlockSpec((3 * A, TB), lambda i: (0, i)),  # [act;logp;ent]
    )

    out = pl.pallas_call(
        partial(actor_kernel, S=S, A=A, H=H, use_action=use_action),
        out_shape=jax.ShapeDtypeStruct((3 * A, B_pad), jnp.float32),
        grid_spec=grid_spec,
        compiler_params=pltpu.CompilerParams(
            dimension_semantics=("parallel",),    # batch tiles shard across TCs
            vmem_limit_bytes=vmem_limit),
        cost_estimate=cost,
    )(xa, w1p, w2h, bpack)

    out = out[:, :B]
    act = out[0:A, :].T
    logp = out[A:2 * A, :].T
    ent = out[2 * A:3 * A, :].T
    return act, logp, ent


def actor_forward(params, state, action=None, key=None, tb_max=65536):
    """Returns (act, act_log_prob, act_entropy), each of shape (B, action_dim)."""
    if action is None:
        assert key is not None, "need a PRNG key to sample"
        # TODO(synk): torch's dist.sample() uses torch RNG; here the N(0,1) noise
        # is drawn with jax.random and the sample is reparameterized in-kernel.
        B = state.shape[0]
        A = params["wmu"].shape[0]
        eps = jax.random.normal(key, (B, A), jnp.float32)
        return _actor_pallas(params, state, eps, use_action=False, tb_max=tb_max)
    return _actor_pallas(params, state, action.astype(jnp.float32),
                         use_action=True, tb_max=tb_max)


def _ref_forward(params, state, eps):
    """Pure-JAX reference (sample path) for correctness checking."""
    h1 = jnp.maximum(state @ params["w1"].T + params["b1"], 0.0)
    h2 = jnp.maximum(h1 @ params["w2"].T + params["b2"], 0.0)
    mu = h2 @ params["wmu"].T + params["bmu"]
    sigma = jax.nn.softplus(h2 @ params["wsig"].T + params["bsig"])
    act = mu + sigma * eps
    half_log2pi = 0.5 * jnp.log(2.0 * jnp.pi)
    logp = -0.5 * ((act - mu) / sigma) ** 2 - jnp.log(sigma) - half_log2pi
    ent = 0.5 + half_log2pi + jnp.log(sigma)
    return act, logp, ent


if __name__ == "__main__":
    state_dim = 3     # Pendulum-v1 observation dim
    action_dim = 1
    batch = 8

    root = jax.random.PRNGKey(0)
    k_params, k_state, k_sample = jax.random.split(root, 3)

    params = init_actor_params(k_params, state_dim, action_dim)
    state = jax.random.normal(k_state, (batch, state_dim), jnp.float32)

    # Sample path (action=None)
    act, logp, ent = actor_forward(params, state, action=None, key=k_sample)
    jax.block_until_ready((act, logp, ent))

    # Correctness check against pure-JAX reference using the same noise draw
    eps = jax.random.normal(k_sample, (batch, action_dim), jnp.float32)
    ract, rlogp, rent = _ref_forward(params, state, eps)
    assert jnp.allclose(act, ract, atol=1e-5, rtol=1e-5)
    assert jnp.allclose(logp, rlogp, atol=1e-5, rtol=1e-5)
    assert jnp.allclose(ent, rent, atol=1e-5, rtol=1e-5)

    # Given-action path
    act2, logp2, ent2 = actor_forward(params, state, action=ract)
    jax.block_until_ready((act2, logp2, ent2))
    assert jnp.allclose(act2, ract, atol=1e-5, rtol=1e-5)
    assert jnp.allclose(logp2, rlogp, atol=1e-5, rtol=1e-5)
    assert jnp.allclose(ent2, rent, atol=1e-5, rtol=1e-5)

    print("KERNEL_OK")
</pallas_src>

<mosaic_0001>
module attributes {stable_mosaic.version = 11 : i64} {
  func.func @actor_kernel(%arg0: i32, %arg1: memref<4x128xf32, #tpu.memory_space<vmem>>, %arg2: memref<16x4xf32, #tpu.memory_space<vmem>>, %arg3: memref<18x16xf32, #tpu.memory_space<vmem>>, %arg4: memref<34x1xf32, #tpu.memory_space<vmem>>, %arg5: memref<3x128xf32, #tpu.memory_space<vmem>>) attributes {dimension_semantics = [#tpu.dimension_semantics<parallel>], iteration_bounds = array<i64: 1>, scalar_prefetch = 0 : i64, scratch_operands = 0 : i64, tpu.core_type = #tpu.core_type<tc>, window_params = [{transform_indices = @transform_0, window_bounds = array<i64: 4, 128>}, {pipeline_mode = #tpu.pipeline_mode<synchronous>, transform_indices = @transform_1, window_bounds = array<i64: 16, 4>}, {pipeline_mode = #tpu.pipeline_mode<synchronous>, transform_indices = @transform_2, window_bounds = array<i64: 18, 16>}, {pipeline_mode = #tpu.pipeline_mode<synchronous>, transform_indices = @transform_3, window_bounds = array<i64: 34, 1>}, {transform_indices = @transform_4, window_bounds = array<i64: 3, 128>}]} {
    %c0 = arith.constant 0 : index
    %c0_0 = arith.constant 0 : index
    %0 = vector.load %arg1[%c0, %c0_0] : memref<4x128xf32, #tpu.memory_space<vmem>>, vector<4x128xf32>
    %c0_1 = arith.constant 0 : index
    %c0_2 = arith.constant 0 : index
    %1 = vector.load %arg2[%c0_1, %c0_2] : memref<16x4xf32, #tpu.memory_space<vmem>>, vector<16x4xf32>
    %cst = arith.constant dense<0.000000e+00> : vector<16x128xf32>
    %2 = tpu.matmul %1, %0, %cst {dimension_numbers = #tpu.dot_dimension_numbers<[1], [0], [0], [1], [0, 0, 1, 1], [], []>} : vector<16x4xf32>, vector<4x128xf32>, vector<16x128xf32> -> vector<16x128xf32>
    %c0_3 = arith.constant 0 : index
    %c0_4 = arith.constant 0 : index
    %3 = vector.load %arg4[%c0_3, %c0_4] : memref<34x1xf32, #tpu.memory_space<vmem>>, vector<16x1xf32>
    %4 = vector.broadcast %3 : vector<16x1xf32> to vector<16x128xf32>
    %5 = arith.addf %2, %4 : vector<16x128xf32>
    %cst_5 = arith.constant 0.000000e+00 : f32
    %6 = vector.broadcast %cst_5 : f32 to vector<16x128xf32>
    %7 = arith.maximumf %5, %6 : vector<16x128xf32>
    %c0_6 = arith.constant 0 : index
    %c0_7 = arith.constant 0 : index
    %8 = vector.load %arg3[%c0_6, %c0_7] : memref<18x16xf32, #tpu.memory_space<vmem>>, vector<16x16xf32>
    %cst_8 = arith.constant dense<0.000000e+00> : vector<16x128xf32>
    %9 = tpu.matmul %8, %7, %cst_8 {dimension_numbers = #tpu.dot_dimension_numbers<[1], [0], [0], [1], [0, 0, 1, 1], [], []>} : vector<16x16xf32>, vector<16x128xf32>, vector<16x128xf32> -> vector<16x128xf32>
    %c16 = arith.constant 16 : index
    %c0_9 = arith.constant 0 : index
    %10 = vector.load %arg4[%c16, %c0_9] : memref<34x1xf32, #tpu.memory_space<vmem>>, vector<16x1xf32>
    %11 = vector.broadcast %10 : vector<16x1xf32> to vector<16x128xf32>
    %12 = arith.addf %9, %11 : vector<16x128xf32>
    %cst_10 = arith.constant 0.000000e+00 : f32
    %13 = vector.broadcast %cst_10 : f32 to vector<16x128xf32>
    %14 = arith.maximumf %12, %13 : vector<16x128xf32>
    %c16_11 = arith.constant 16 : index
    %c0_12 = arith.constant 0 : index
    %15 = vector.load %arg3[%c16_11, %c0_12] : memref<18x16xf32, #tpu.memory_space<vmem>>, vector<2x16xf32>
    %cst_13 = arith.constant dense<0.000000e+00> : vector<2x128xf32>
    %16 = tpu.matmul %15, %14, %cst_13 {dimension_numbers = #tpu.dot_dimension_numbers<[1], [0], [0], [1], [0, 0, 1, 1], [], []>} : vector<2x16xf32>, vector<16x128xf32>, vector<2x128xf32> -> vector<2x128xf32>
    %c32 = arith.constant 32 : index
    %c0_14 = arith.constant 0 : index
    %17 = vector.load %arg4[%c32, %c0_14] : memref<34x1xf32, #tpu.memory_space<vmem>>, vector<2x1xf32>
    %18 = vector.broadcast %17 : vector<2x1xf32> to vector<2x128xf32>
    %19 = arith.addf %16, %18 : vector<2x128xf32>
    %20 = vector.extract_strided_slice %19 {offsets = [0, 0], sizes = [1, 128], strides = [1, 1]} : vector<2x128xf32> to vector<1x128xf32>
    %21 = vector.extract_strided_slice %19 {offsets = [1, 0], sizes = [1, 128], strides = [1, 1]} : vector<2x128xf32> to vector<1x128xf32>
    %cst_15 = arith.constant 0.000000e+00 : f32
    %22 = vector.broadcast %cst_15 : f32 to vector<1x128xf32>
    %23 = arith.maximumf %21, %22 : vector<1x128xf32>
    %24 = math.absf %21 : vector<1x128xf32>
    %cst_16 = arith.constant 0.000000e+00 : f32
    %25 = vector.broadcast %cst_16 : f32 to vector<1x128xf32>
    %26 = arith.subf %25, %24 : vector<1x128xf32>
    %27 = math.exp %26 : vector<1x128xf32>
    %28 = math.log1p %27 : vector<1x128xf32>
    %29 = arith.addf %23, %28 : vector<1x128xf32>
    %30 = math.log %29 : vector<1x128xf32>
    %c3 = arith.constant 3 : index
    %c0_17 = arith.constant 0 : index
    %31 = vector.load %arg1[%c3, %c0_17] : memref<4x128xf32, #tpu.memory_space<vmem>>, vector<1x128xf32>
    %32 = arith.mulf %29, %31 : vector<1x128xf32>
    %33 = arith.addf %20, %32 : vector<1x128xf32>
    %c0_18 = arith.constant 0 : index
    %c0_19 = arith.constant 0 : index
    %34 = vector.load %arg5[%c0_18, %c0_19] : memref<3x128xf32, #tpu.memory_space<vmem>>, vector<1x128xf32>
    tpu.vector_store %arg5[%c0_18, %c0_19], %33 {strides = array<i32>} : memref<3x128xf32, #tpu.memory_space<vmem>>, vector<1x128xf32>,
    %cst_20 = arith.constant -5.000000e-01 : f32
    %35 = vector.broadcast %cst_20 : f32 to vector<1x128xf32>
    %36 = arith.mulf %35, %31 : vector<1x128xf32>
    %37 = arith.mulf %36, %31 : vector<1x128xf32>
    %38 = arith.subf %37, %30 : vector<1x128xf32>
    %cst_21 = arith.constant 0.918938517 : f32
    %39 = vector.broadcast %cst_21 : f32 to vector<1x128xf32>
    %40 = arith.subf %38, %39 : vector<1x128xf32>
    %c1 = arith.constant 1 : index
    %c0_22 = arith.constant 0 : index
    %41 = vector.load %arg5[%c1, %c0_22] : memref<3x128xf32, #tpu.memory_space<vmem>>, vector<1x128xf32>
    tpu.vector_store %arg5[%c1, %c0_22], %40 {strides = array<i32>} : memref<3x128xf32, #tpu.memory_space<vmem>>, vector<1x128xf32>,
    %cst_23 = arith.constant 1.41893852 : f32
    %42 = vector.broadcast %cst_23 : f32 to vector<1x128xf32>
    %43 = arith.addf %42, %30 : vector<1x128xf32>
    %c2 = arith.constant 2 : index
    %c0_24 = arith.constant 0 : index
    %44 = vector.load %arg5[%c2, %c0_24] : memref<3x128xf32, #tpu.memory_space<vmem>>, vector<1x128xf32>
    tpu.vector_store %arg5[%c2, %c0_24], %43 {strides = array<i32>} : memref<3x128xf32, #tpu.memory_space<vmem>>, vector<1x128xf32>,
    return
  }
  func.func @transform_0(%arg0: i32) -> (i32, i32) {
    %c0_i32 = arith.constant 0 : i32
    %c0_i32_0 = arith.constant 0 : i32
    return %c0_i32, %arg0 : i32, i32
  }
  func.func @transform_1(%arg0: i32) -> (i32, i32) {
    %c0_i32 = arith.constant 0 : i32
    %c0_i32_0 = arith.constant 0 : i32
    %c0_i32_1 = arith.constant 0 : i32
    return %c0_i32, %c0_i32_0 : i32, i32
  }
  func.func @transform_2(%arg0: i32) -> (i32, i32) {
    %c0_i32 = arith.constant 0 : i32
    %c0_i32_0 = arith.constant 0 : i32
    %c0_i32_1 = arith.constant 0 : i32
    return %c0_i32, %c0_i32_0 : i32, i32
  }
  func.func @transform_3(%arg0: i32) -> (i32, i32) {
    %c0_i32 = arith.constant 0 : i32
    %c0_i32_0 = arith.constant 0 : i32
    %c0_i32_1 = arith.constant 0 : i32
    return %c0_i32, %c0_i32_0 : i32, i32
  }
  func.func @transform_4(%arg0: i32) -> (i32, i32) {
    %c0_i32 = arith.constant 0 : i32
    %c0_i32_0 = arith.constant 0 : i32
    return %c0_i32, %arg0 : i32, i32
  }
}

</mosaic_0001>

<llo_original>
// kernel: _actor_pallas.1
$region0: #{_actor_pallas.1}
  #allocation0 [shape = 'u32[]', space=smem, size = 0x4, offset = 0x4, fixed_abs, tag = 'smem constant byte address 0x4 - core index']
  #allocation1 [shape = 'u32[144,128]{1,0:T(1,128)}', space=vmem, size = 0x12000, scoped, tag = 'internal scratch']
  %s0 = inlined_call_operand.vmem [shape: f32[4,128], index: 0, kind: input, shape index: {}]
  %s1 = inlined_call_operand.vmem [shape: f32[16,4], index: 1, kind: input, shape index: {}]
  %s2 = inlined_call_operand.vmem [shape: f32[18,16], index: 2, kind: input, shape index: {}]
  %s3 = inlined_call_operand.vmem [shape: f32[34,1], index: 3, kind: input, shape index: {}]
  %s4 = inlined_call_operand.vmem [shape: f32[3,128], index: 4, kind: output, shape index: {}]
  %s5 = sld [smem:[#allocation0]]
  $region26: #{_actor_pallas.1} parent=0
    _
  %s7 = ssub.s32 1, %s5
  %s8 = scalar_select 0, %s7, %s5
  // Predicated region
  $region2: #{_actor_pallas.1} parent=0 // pred_check
    _
  $region3: #{_actor_pallas.1} parent=0 // pred_check_branch
    %10 = sbr.rel (0) target = $region5
  $region4: #{_actor_pallas.1} parent=0 // pred_region
    _
  $region5: #{_actor_pallas.1} parent=0 // pred_fallthru
    _
  // Predicated region
  $region6: #{_actor_pallas.1} parent=0 // pred_check
    _
  $region7: #{_actor_pallas.1} parent=0 // pred_check_branch
    %12 = sbr.rel (0) target = $region9
  $region8: #{_actor_pallas.1} parent=0 // pred_region
    _
  $region9: #{_actor_pallas.1} parent=0 // pred_fallthru
    _
  // Predicated region
  $region10: #{_actor_pallas.1} parent=0 // pred_check
    _
  $region11: #{_actor_pallas.1} parent=0 // pred_check_branch
    %14 = sbr.rel (0) target = $region13
  $region12: #{_actor_pallas.1} parent=0 // pred_region
    _
  $region13: #{_actor_pallas.1} parent=0 // pred_fallthru
    _
  // Predicated region
  $region14: #{_actor_pallas.1} parent=0 // pred_check
    _
  $region15: #{_actor_pallas.1} parent=0 // pred_check_branch
    %16 = sbr.rel (0) target = $region17
  $region16: #{_actor_pallas.1} parent=0 // pred_region
    _
  $region17: #{_actor_pallas.1} parent=0 // pred_fallthru
    _
  %v17 = vld [vmem:[%s0] sm:$0xf]
  %v18 = vld [vmem:[%s1] sm:$0xff]
  %v19 = vld [vmem:[%s1 + $0x8] sm:$0xff]
  %v20 = vld [vmem:[%s3] sm:$0xff]
  %v21 = vld [vmem:[%s3 + $0x8] sm:$0xff]
  %23 = vset.pattern.permute.xlu0 0
  %24 = vperm.xlu0 %23, %v20
  %v25 = vpop.permute.xlu0 %24
  %28 = vset.pattern.permute.xlu0 0
  %29 = vperm.xlu0 %28, %v21
  %v30 = vpop.permute.xlu0 %29
  %vm32 = vcmask 31744
  %v34 = vsel %vm32, %v18, 0
  %v37 = vsel %vm32, %v19, 0
  %vm39 = vcmask 1043456
  %v41 = vsel %vm39, %v17, 0
  %43 = vmatprep.subr.mxu0 0.0
  %44 = vmatpush1.msra.mxu0 %v41
  %45 = vmatprep.subr.mxu0 0.0
  %46 = vmatpush1.msra.mxu0 0.0
  %47 = vmatprep.subr.mxu0 0.0
  %48 = vmatpush1.msra.mxu0 0.0
  %49 = vmatprep.subr.mxu0 0.0
  %50 = vmatpush1.msra.mxu0 0.0
  %51 = vmatprep.subr.mxu0 0.0
  %52 = vmatpush1.msra.mxu0 0.0
  %53 = vmatprep.subr.mxu0 0.0
  %54 = vmatpush1.msra.mxu0 0.0
  %55 = vmatprep.subr.mxu0 0.0
  %56 = vmatpush1.msra.mxu0 0.0
  %57 = vmatprep.subr.mxu0 0.0
  %58 = vmatpush1.msra.mxu0 0.0
  %59 = vmatprep.subr.mxu0 0.0
  %60 = vmatpush1.msra.mxu0 0.0
  %61 = vmatprep.subr.mxu0 0.0
  %62 = vmatpush1.msra.mxu0 0.0
  %63 = vmatprep.subr.mxu0 0.0
  %64 = vmatpush1.msra.mxu0 0.0
  %65 = vmatprep.subr.mxu0 0.0
  %66 = vmatpush1.msra.mxu0 0.0
  %67 = vmatprep.subr.mxu0 0.0
  %68 = vmatpush1.msra.mxu0 0.0
  %69 = vmatprep.subr.mxu0 0.0
  %70 = vmatpush1.msra.mxu0 0.0
  %71 = vmatprep.subr.mxu0 0.0
  %72 = vmatpush1.msra.mxu0 0.0
  %73 = vmatprep.subr.mxu0 0.0
  %74 = vmatpush1.msra.mxu0 0.0
  %75 = vmatprep.subr.mxu0 0.0
  %76 = vmatpush1.msra.mxu0 0.0
  %77 = vmatprep.subr.mxu0 0.0
  %78 = vmatpush1.msra.mxu0 0.0
  %79 = vmatprep.subr.mxu0 0.0
  %80 = vmatpush1.msra.mxu0 0.0
  %81 = vmatprep.subr.mxu0 0.0
  %82 = vmatpush1.msra.mxu0 0.0
  %83 = vmatprep.subr.mxu0 0.0
  %84 = vmatpush1.msra.mxu0 0.0
  %85 = vmatprep.subr.mxu0 0.0
  %86 = vmatpush1.msra.mxu0 0.0
  %87 = vmatprep.subr.mxu0 0.0
  %88 = vmatpush1.msra.mxu0 0.0
  %89 = vmatprep.subr.mxu0 0.0
  %90 = vmatpush1.msra.mxu0 0.0
  %91 = vmatprep.subr.mxu0 0.0
  %92 = vmatpush1.msra.mxu0 0.0
  %93 = vmatprep.subr.mxu0 0.0
  %94 = vmatpush1.msra.mxu0 0.0
  %95 = vmatprep.subr.mxu0 0.0
  %96 = vmatpush1.msra.mxu0 0.0
  %97 = vmatprep.subr.mxu0 0.0
  %98 = vmatpush1.msra.mxu0 0.0
  %99 = vmatprep.subr.mxu0 0.0
  %100 = vmatpush1.msra.mxu0 0.0
  %101 = vmatprep.subr.mxu0 0.0
  %102 = vmatpush1.msra.mxu0 0.0
  %103 = vmatprep.subr.mxu0 0.0
  %104 = vmatpush1.msra.mxu0 0.0
  %105 = vmatprep.subr.mxu0 0.0
  %106 = vmatpush1.msra.mxu0 0.0
  %107 = vmatprep.mubr.f32.mxu0 0.0
  %108 = vmatmul.mubr.f32.gmra.mrb[0].mxu0 %v34
  %v109 = vpop.f32.mrb[0].mxu0
  %v110 = vadd.f32 %v25, %v109
  %v111 = vpop.f32.mrb[0].mxu0
  %112 = vmatprep.mubr.f32.mxu0 0.0
  %113 = vmatmul.mubr.f32.gmra.mrb[0].mxu0 %v37
  %v114 = vpop.f32.mrb[0].mxu0
  %v115 = vadd.f32 %v30, %v114
  %v116 = vpop.f32.mrb[0].mxu0
  %117 = vdwg.mxu0
  %v118 = vmax.f32 %v110, 0.0
  %v119 = vmax.f32 %v115, 0.0
  %v120 = vld [vmem:[%s2] sm:$0xff]
  %v121 = vld [vmem:[%s2 + $0x8] sm:$0xff]
  %v122 = vld [vmem:[%s3 + $0x10] sm:$0xff]
  %v123 = vld [vmem:[%s3 + $0x18] sm:$0xff]
  %125 = vset.pattern.permute.xlu0 0
  %126 = vperm.xlu0 %125, %v122
  %v127 = vpop.permute.xlu0 %126
  %130 = vset.pattern.permute.xlu0 0
  %131 = vperm.xlu0 %130, %v123
  %v132 = vpop.permute.xlu0 %131
  %vm134 = vcmask 130048
  %v136 = vsel %vm134, %v120, 0
  %v139 = vsel %vm134, %v121, 0
  %141 = vmatprep.subr.mxu0 0.0
  %142 = vmatpush1.msra.mxu0 %v118
  %143 = vmatprep.subr.mxu0 0.0
  %144 = vmatpush1.msra.mxu0 %v119
  %145 = vmatprep.subr.mxu0 0.0
  %146 = vmatpush1.msra.mxu0 0.0
  %147 = vmatprep.subr.mxu0 0.0
  %148 = vmatpush1.msra.mxu0 0.0
  %149 = vmatprep.subr.mxu0 0.0
  %150 = vmatpush1.msra.mxu0 0.0
  %151 = vmatprep.subr.mxu0 0.0
  %152 = vmatpush1.msra.mxu0 0.0
  %153 = vmatprep.subr.mxu0 0.0
  %154 = vmatpush1.msra.mxu0 0.0
  %155 = vmatprep.subr.mxu0 0.0
  %156 = vmatpush1.msra.mxu0 0.0
  %157 = vmatprep.subr.mxu0 0.0
  %158 = vmatpush1.msra.mxu0 0.0
  %159 = vmatprep.subr.mxu0 0.0
  %160 = vmatpush1.msra.mxu0 0.0
  %161 = vmatprep.subr.mxu0 0.0
  %162 = vmatpush1.msra.mxu0 0.0
  %163 = vmatprep.subr.mxu0 0.0
  %164 = vmatpush1.msra.mxu0 0.0
  %165 = vmatprep.subr.mxu0 0.0
  %166 = vmatpush1.msra.mxu0 0.0
  %167 = vmatprep.subr.mxu0 0.0
  %168 = vmatpush1.msra.mxu0 0.0
  %169 = vmatprep.subr.mxu0 0.0
  %170 = vmatpush1.msra.mxu0 0.0
  %171 = vmatprep.subr.mxu0 0.0
  %172 = vmatpush1.msra.mxu0 0.0
  %173 = vmatprep.subr.mxu0 0.0
  %174 = vmatpush1.msra.mxu0 0.0
  %175 = vmatprep.subr.mxu0 0.0
  %176 = vmatpush1.msra.mxu0 0.0
  %177 = vmatprep.subr.mxu0 0.0
  %178 = vmatpush1.msra.mxu0 0.0
  %179 = vmatprep.subr.mxu0 0.0
  %180 = vmatpush1.msra.mxu0 0.0
  %181 = vmatprep.subr.mxu0 0.0
  %182 = vmatpush1.msra.mxu0 0.0
  %183 = vmatprep.subr.mxu0 0.0
  %184 = vmatpush1.msra.mxu0 0.0
  %185 = vmatprep.subr.mxu0 0.0
  %186 = vmatpush1.msra.mxu0 0.0
  %187 = vmatprep.subr.mxu0 0.0
  %188 = vmatpush1.msra.mxu0 0.0
  %189 = vmatprep.subr.mxu0 0.0
  %190 = vmatpush1.msra.mxu0 0.0
  %191 = vmatprep.subr.mxu0 0.0
  %192 = vmatpush1.msra.mxu0 0.0
  %193 = vmatprep.subr.mxu0 0.0
  %194 = vmatpush1.msra.mxu0 0.0
  %195 = vmatprep.subr.mxu0 0.0
  %196 = vmatpush1.msra.mxu0 0.0
  %197 = vmatprep.subr.mxu0 0.0
  %198 = vmatpush1.msra.mxu0 0.0
  %199 = vmatprep.subr.mxu0 0.0
  %200 = vmatpush1.msra.mxu0 0.0
  %201 = vmatprep.subr.mxu0 0.0
  %202 = vmatpush1.msra.mxu0 0.0
  %203 = vmatprep.subr.mxu0 0.0
  %204 = vmatpush1.msra.mxu0 0.0
  %205 = vmatprep.mubr.f32.mxu0 0.0
  %206 = vmatmul.mubr.f32.gmra.mrb[0].mxu0 %v136
  %v207 = vpop.f32.mrb[0].mxu0
  %v208 = vadd.f32 %v127, %v207
  %v209 = vpop.f32.mrb[0].mxu0
  %210 = vmatprep.mubr.f32.mxu0 0.0
  %211 = vmatmul.mubr.f32.gmra.mrb[0].mxu0 %v139
  %v212 = vpop.f32.mrb[0].mxu0
  %v213 = vadd.f32 %v132, %v212
  %v214 = vpop.f32.mrb[0].mxu0
  %215 = vdwg.mxu0
  %v216 = vmax.f32 %v208, 0.0
  %v217 = vmax.f32 %v213, 0.0
  %v218 = vld [vmem:[%s2 + $0x10] sm:$0x3]
  %v219 = vld [vmem:[%s3 + $0x20] sm:$0x3]
  %221 = vset.pattern.permute.xlu0 0
  %222 = vperm.xlu0 %221, %v219
  %v223 = vpop.permute.xlu0 %222
  %v226 = vsel %vm134, %v218, 0
  %228 = vmatprep.subr.mxu0 0.0
  %229 = vmatpush1.msra.mxu0 %v216
  %230 = vmatprep.subr.mxu0 0.0
  %231 = vmatpush1.msra.mxu0 %v217
  %232 = vmatprep.subr.mxu0 0.0
  %233 = vmatpush1.msra.mxu0 0.0
  %234 = vmatprep.subr.mxu0 0.0
  %235 = vmatpush1.msra.mxu0 0.0
  %236 = vmatprep.subr.mxu0 0.0
  %237 = vmatpush1.msra.mxu0 0.0
  %238 = vmatprep.subr.mxu0 0.0
  %239 = vmatpush1.msra.mxu0 0.0
  %240 = vmatprep.subr.mxu0 0.0
  %241 = vmatpush1.msra.mxu0 0.0
  %242 = vmatprep.subr.mxu0 0.0
  %243 = vmatpush1.msra.mxu0 0.0
  %244 = vmatprep.subr.mxu0 0.0
  %245 = vmatpush1.msra.mxu0 0.0
  %246 = vmatprep.subr.mxu0 0.0
  %247 = vmatpush1.msra.mxu0 0.0
  %248 = vmatprep.subr.mxu0 0.0
  %249 = vmatpush1.msra.mxu0 0.0
  %250 = vmatprep.subr.mxu0 0.0
  %251 = vmatpush1.msra.mxu0 0.0
  %252 = vmatprep.subr.mxu0 0.0
  %253 = vmatpush1.msra.mxu0 0.0
  %254 = vmatprep.subr.mxu0 0.0
  %255 = vmatpush1.msra.mxu0 0.0
  %256 = vmatprep.subr.mxu0 0.0
  %257 = vmatpush1.msra.mxu0 0.0
  %258 = vmatprep.subr.mxu0 0.0
  %259 = vmatpush1.msra.mxu0 0.0
  %260 = vmatprep.subr.mxu0 0.0
  %261 = vmatpush1.msra.mxu0 0.0
  %262 = vmatprep.subr.mxu0 0.0
  %263 = vmatpush1.msra.mxu0 0.0
  %264 = vmatprep.subr.mxu0 0.0
  %265 = vmatpush1.msra.mxu0 0.0
  %266 = vmatprep.subr.mxu0 0.0
  %267 = vmatpush1.msra.mxu0 0.0
  %268 = vmatprep.subr.mxu0 0.0
  %269 = vmatpush1.msra.mxu0 0.0
  %270 = vmatprep.subr.mxu0 0.0
  %271 = vmatpush1.msra.mxu0 0.0
  %272 = vmatprep.subr.mxu0 0.0
  %273 = vmatpush1.msra.mxu0 0.0
  %274 = vmatprep.subr.mxu0 0.0
  %275 = vmatpush1.msra.mxu0 0.0
  %276 = vmatprep.subr.mxu0 0.0
  %277 = vmatpush1.msra.mxu0 0.0
  %278 = vmatprep.subr.mxu0 0.0
  %279 = vmatpush1.msra.mxu0 0.0
  %280 = vmatprep.subr.mxu0 0.0
  %281 = vmatpush1.msra.mxu0 0.0
  %282 = vmatprep.subr.mxu0 0.0
  %283 = vmatpush1.msra.mxu0 0.0
  %284 = vmatprep.subr.mxu0 0.0
  %285 = vmatpush1.msra.mxu0 0.0
  %286 = vmatprep.subr.mxu0 0.0
  %287 = vmatpush1.msra.mxu0 0.0
  %288 = vmatprep.subr.mxu0 0.0
  %289 = vmatpush1.msra.mxu0 0.0
  %290 = vmatprep.subr.mxu0 0.0
  %291 = vmatpush1.msra.mxu0 0.0
  %292 = vmatprep.mubr.f32.mxu0 0.0
  %293 = vmatmul.mubr.f32.gmra.mrb[0].mxu0 %v226
  %v294 = vpop.f32.mrb[0].mxu0
  %v295 = vadd.f32 %v223, %v294
  %v296 = vpop.f32.mrb[0].mxu0
  %297 = vdwg.mxu0
  %v298 = vmax.f32 %v295, 0.0
  %v299 = vand.u32 2147483647, %v295
  %v300 = vsub.f32 0.0, %v299
  %v301 = vmul.f32 %v300, 1.442695
  %v302 = vpow.pop %v301
  %v303 = vadd.f32 %v302, 1.0
  %v304 = vlog2.pop %v303
  %v305 = vmul.f32 %v304, 0.6931472
  %v306 = vmul.f32 -0.5, %v302
  %v307 = vadd.f32 %v306, 1.0
  %v308 = vmul.f32 %v307, %v302
  %v309 = vand.u32 2147483647, %v302
  %vm310 = vcmp.lt.f32.partialorder %v309, 0.0004427343
  %v311 = vsel %vm310, %v308, %v305
  %v312 = vadd.f32 %v298, %v311
  %v313 = vlog2.pop %v312
  %v314 = vmul.f32 %v313, 0.6931472
  %v315 = vld [vmem:[%s0 + $0x3] sm:$0x1]
  %v317 = vrot.slane %v315, 7
  %v319 = vmul.f32 %v312, %v317
  %v321 = vrot.slane %v319, 1
  %v323 = vadd.f32 %v295, %v321
  %324 = vst [vmem:[%s4] sm:$0x1] %v323
  %v325 = vmul.f32 %v315, -0.5
  %v326 = vmul.f32 %v325, %v315
  %v328 = vrot.slane %v314, 1
  %v330 = vsub.f32 %v326, %v328
  %v331 = vsub.f32 %v330, 0.9189385
  %332 = vst [vmem:[%s4 + $0x1] sm:$0x1] %v331
  %v333 = vadd.f32 %v314, 1.4189385
  %334 = vst [vmem:[%s4 + $0x1] sm:$0x2] %v333
  // Predicated region
  $region18: #{_actor_pallas.1} parent=0 // pred_check
    _
  $region19: #{_actor_pallas.1} parent=0 // pred_check_branch
    %336 = sbr.rel (0) target = $region21
  $region20: #{_actor_pallas.1} parent=0 // pred_region
    _
  $region21: #{_actor_pallas.1} parent=0 // pred_fallthru
    _
  // Predicated region
  $region22: #{_actor_pallas.1} parent=0 // pred_check
    _
  $region23: #{_actor_pallas.1} parent=0 // pred_check_branch
    %338 = sbr.rel (0) target = $region25
  $region24: #{_actor_pallas.1} parent=0 // pred_region
    _
  $region25: #{_actor_pallas.1} parent=0 // pred_fallthru
    _

</llo_original>
